<compile_context>
chip_gen: v7x
topology: tpu7x:2x2x1
jax: 0.10.0
libtpu: 0.0.40
codegen_flags: <defaults>
</compile_context>

<pallas_src>
import functools

import jax
import jax.numpy as jnp
from jax import lax
from jax.experimental import pallas as pl
from jax.experimental.pallas import tpu as pltpu

_LANES = 128
_SUBLANES = 8


def _post_processor_kernel(logits_ref, o_ref, *, pose_num):
    """Row-wise masked softmax over cols < pose_num, sigmoid over the rest."""
    x = logits_ref[...].astype(jnp.float32)                       # (TM, CP)
    col = lax.broadcasted_iota(jnp.int32, x.shape, dimension=1)   # (TM, CP)
    pose_mask = col < pose_num

    # Numerically-stable softmax restricted to the pose columns.
    big_neg = jnp.float32(-1e30)
    masked = jnp.where(pose_mask, x, big_neg)
    m = jnp.max(masked, axis=-1, keepdims=True)
    e = jnp.exp(masked - m)                                       # exactly 0 outside pose block
    denom = jnp.sum(e, axis=-1, keepdims=True)
    pose_prob = e / denom

    # Sigmoid for the interaction columns (padding columns are sliced off later).
    inter_prob = jax.nn.sigmoid(x)

    o_ref[...] = jnp.where(pose_mask, pose_prob, inter_prob).astype(o_ref.dtype)


def _round_up(v, m):
    return ((v + m - 1) // m) * m


@functools.partial(jax.jit, static_argnames=("pose_action_num",))
def post_processor_action_prob(class_logits, *, pose_action_num):
    """class_logits: (N, C) -> (N, C) action probabilities."""
    n, c = class_logits.shape

    # Lane-dense layout: pad classes to a multiple of 128 lanes; tile rows in
    # multiples of 8 sublanes. The whole per-tile problem fits in VMEM, so there
    # is a single class block and only a (trivially parallel) row grid axis.
    cp = _round_up(c, _LANES)
    tm = min(512, _round_up(n, _SUBLANES))
    n_pad = _round_up(n, tm)

    x = jnp.pad(class_logits, ((0, n_pad - n), (0, cp - c)))

    out = pl.pallas_call(
        functools.partial(_post_processor_kernel, pose_num=pose_action_num),
        out_shape=jax.ShapeDtypeStruct((n_pad, cp), class_logits.dtype),
        grid_spec=pltpu.PrefetchScalarGridSpec(
            num_scalar_prefetch=0,
            grid=(n_pad // tm,),
            in_specs=[pl.BlockSpec((tm, cp), lambda i: (i, 0))],
            out_specs=pl.BlockSpec((tm, cp), lambda i: (i, 0)),
        ),
        compiler_params=pltpu.CompilerParams(
            dimension_semantics=("parallel",),   # rows are independent
        ),
    )(x)

    return out[:n, :c]


def post_processor_forward(class_logits, boxes, *, pose_action_num):
    """Mirror of PostProcessor.forward.

    `boxes` is a list of dicts: {"bbox": (Bi, 4) array, "size": (w, h)}.
    Returns one dict per image with the added "scores" field.
    """
    action_prob = post_processor_action_prob(
        class_logits, pose_action_num=pose_action_num
    )
    # TODO(synk): BoxList is a host-side Python container; the per-image split
    # and field bookkeeping stay in the wrapper (no Pallas equivalent).
    results = []
    start = 0
    for box in boxes:
        n_i = box["bbox"].shape[0]
        results.append(
            {
                "bbox": box["bbox"],
                "size": box["size"],
                "mode": "xyxy",
                "scores": action_prob[start : start + n_i],
            }
        )
        start += n_i
    return results


if __name__ == "__main__":
    # Small synthetic config: 32 action classes (14 pose + 18 interaction),
    # 6 boxes split across 2 images as [4, 2].
    pose_action_num = 14
    num_classes = 32
    boxes_per_image = [4, 2]
    n_total = sum(boxes_per_image)

    key = jax.random.PRNGKey(0)
    k_logits, k_box = jax.random.split(key)
    class_logits = jax.random.normal(k_logits, (n_total, num_classes), dtype=jnp.float32)
    bbox_all = 100.0 * jax.random.uniform(k_box, (n_total, 4), dtype=jnp.float32)

    boxes = []
    start = 0
    for b in boxes_per_image:
        boxes.append({"bbox": bbox_all[start : start + b], "size": (320, 240)})
        start += b

    results = post_processor_forward(
        class_logits, boxes, pose_action_num=pose_action_num
    )
    scores = jax.block_until_ready([r["scores"] for r in results])

    # Cross-check against plain JAX reference of the PyTorch forward.
    ref_pose = jax.nn.softmax(class_logits[:, :pose_action_num], axis=-1)
    ref_inter = jax.nn.sigmoid(class_logits[:, pose_action_num:])
    ref = jnp.concatenate([ref_pose, ref_inter], axis=1)

    got = jnp.concatenate(scores, axis=0)
    assert got.shape == (n_total, num_classes)
    assert jnp.allclose(got, ref, atol=1e-5, rtol=1e-5)
    for s, b in zip(scores, boxes_per_image):
        assert s.shape == (b, num_classes)

    print("KERNEL_OK")
</pallas_src>

<mosaic_0001>
module attributes {stable_mosaic.version = 11 : i64} {
  func.func @_post_processor_kernel(%arg0: i32, %arg1: memref<8x128xf32, #tpu.memory_space<vmem>>, %arg2: memref<8x128xf32, #tpu.memory_space<vmem>>) attributes {dimension_semantics = [#tpu.dimension_semantics<parallel>], iteration_bounds = array<i64: 1>, scalar_prefetch = 0 : i64, scratch_operands = 0 : i64, tpu.core_type = #tpu.core_type<tc>, window_params = [{transform_indices = @transform_0, window_bounds = array<i64: 8, 128>}, {transform_indices = @transform_1, window_bounds = array<i64: 8, 128>}]} {
    %c0 = arith.constant 0 : index
    %c0_0 = arith.constant 0 : index
    %0 = vector.load %arg1[%c0, %c0_0] : memref<8x128xf32, #tpu.memory_space<vmem>>, vector<8x128xf32>
    %1 = tpu.iota {dimensions = array<i32: 1>} : vector<8x128xi32>
    %c14_i32 = arith.constant 14 : i32
    %2 = vector.broadcast %c14_i32 : i32 to vector<8x128xi32>
    %3 = arith.cmpi slt, %1, %2 : vector<8x128xi32>
    %cst = arith.constant -1.000000e+30 : f32
    %4 = vector.broadcast %cst : f32 to vector<8x128xf32>
    %5 = arith.select %3, %0, %4 : vector<8x128xi1>, vector<8x128xf32>
    %cst_1 = arith.constant dense<0xFF800000> : vector<8xf32>
    %6 = vector.multi_reduction <maximumf>, %5, %cst_1 [1] : vector<8x128xf32> to vector<8xf32>
    %7 = vector.shape_cast %6 : vector<8xf32> to vector<8x1xf32>
    %8 = vector.broadcast %7 : vector<8x1xf32> to vector<8x128xf32>
    %9 = arith.subf %5, %8 : vector<8x128xf32>
    %10 = math.exp %9 : vector<8x128xf32>
    %cst_2 = arith.constant dense<0.000000e+00> : vector<8xf32>
    %11 = vector.multi_reduction <add>, %10, %cst_2 [1] : vector<8x128xf32> to vector<8xf32>
    %12 = vector.shape_cast %11 : vector<8xf32> to vector<8x1xf32>
    %13 = vector.broadcast %12 : vector<8x1xf32> to vector<8x128xf32>
    %14 = arith.divf %10, %13 : vector<8x128xf32>
    %15 = arith.negf %0 : vector<8x128xf32>
    %16 = math.exp %15 : vector<8x128xf32>
    %cst_3 = arith.constant 1.000000e+00 : f32
    %17 = vector.broadcast %cst_3 : f32 to vector<8x128xf32>
    %18 = arith.addf %17, %16 : vector<8x128xf32>
    %19 = arith.divf %17, %18 : vector<8x128xf32>
    %20 = arith.select %3, %14, %19 : vector<8x128xi1>, vector<8x128xf32>
    %c0_4 = arith.constant 0 : index
    %c0_5 = arith.constant 0 : index
    %21 = vector.load %arg2[%c0_4, %c0_5] : memref<8x128xf32, #tpu.memory_space<vmem>>, vector<8x128xf32>
    tpu.vector_store %arg2[%c0_4, %c0_5], %20 {strides = array<i32>} : memref<8x128xf32, #tpu.memory_space<vmem>>, vector<8x128xf32>,
    return
  }
  func.func @transform_0(%arg0: i32) -> (i32, i32) {
    %c0_i32 = arith.constant 0 : i32
    %c0_i32_0 = arith.constant 0 : i32
    return %arg0, %c0_i32 : i32, i32
  }
  func.func @transform_1(%arg0: i32) -> (i32, i32) {
    %c0_i32 = arith.constant 0 : i32
    %c0_i32_0 = arith.constant 0 : i32
    return %arg0, %c0_i32 : i32, i32
  }
}

</mosaic_0001>

<llo_original>
// kernel: post_processor_action_prob.1
$region0: #{post_processor_action_prob.1}
  #allocation0 [shape = 'u32[]', space=smem, size = 0x4, offset = 0x4, fixed_abs, tag = 'smem constant byte address 0x4 - core index']
  #allocation1 [shape = 'u32[144,128]{1,0:T(1,128)}', space=vmem, size = 0x12000, scoped, tag = 'internal scratch']
  %s0 = inlined_call_operand.vmem [shape: f32[8,128], index: 0, kind: input, shape index: {}]
  %s1 = inlined_call_operand.hbm [shape: f32[8,128], index: 1, kind: output, shape index: {}]
  %s2 = sld [smem:[#allocation0]]
  $region14: #{post_processor_action_prob.1} parent=0
    _
  %s4 = ssub.s32 1, %s2
  %s5 = scalar_select 0, %s4, %s2
  $region1: #{post_processor_action_prob.1} parent=0
    #allocation2 [shape = 'u8[4096]{0}', space=vmem, size = 0x1000, scoped, tag = 'output window, operand 0, single buffered']
    #allocation3 [shape = 's32[1]{0}', space=sflag, size = 0x4, scoped, tag = 'scoped memory for post_processor_action_prob.1']
    %6 = vsyncpa [#allocation3], 0
    // Predicated region
    $region2: #{post_processor_action_prob.1} parent=1 // pred_check
      _
    $region3: #{post_processor_action_prob.1} parent=1 // pred_check_branch
      %8 = sbr.rel (0) target = $region5
    $region4: #{post_processor_action_prob.1} parent=1 // pred_region
      _
    $region5: #{post_processor_action_prob.1} parent=1 // pred_fallthru
      _
    %v9 = vld [vmem:[%s0] sm:$0xff]
    %v10 = vlaneseq
    %v11 = vand.u32 %v10, 127
    %vm12 = vcmp.lt.s32.totalorder %v11, 14
    %v13 = vsel %vm12, %v9, -1e+30
    %14 = vmax.xlane.f32.xlu0 %v13
    %v15 = vpop.xlane.xlu0 %14
    %v16 = vsub.f32 %v13, %v15
    %v17 = vmul.f32 %v16, 1.442695
    %v18 = vpow.pop %v17
    %19 = vadd.xlane.f32.xlu0 %v18
    %v20 = vpop.xlane.xlu0 %19
    %v21 = vrcp.pop %v20
    %v22 = vmul.f32 %v18, %v21
    %v23 = vxor.u32 %v9, 2147483648
    %v24 = vmul.f32 %v23, 1.442695
    %v25 = vpow.pop %v24
    %v26 = vadd.f32 %v25, 1.0
    %v27 = vrcp.pop %v26
    %v28 = vmul.f32 1.0, %v27
    %v29 = vsel %vm12, %v22, %v28
    %30 = vst [vmem:[#allocation2] sm:$0xff] %v29
    // Predicated region
    $region6: #{post_processor_action_prob.1} parent=1 // pred_check
      _
    $region7: #{post_processor_action_prob.1} parent=1 // pred_check_branch
      %32 = sbr.rel (0) target = $region9
    $region8: #{post_processor_action_prob.1} parent=1 // pred_region
      %s34 = ssub.s32 128, 128
      %35 = vsyncadd [#allocation3], %s34
      %s37 = sshll.u32 [#allocation2], 4
      %s38 = int_to_ptr.vmem [resolvable:$true] %s37
      %40 = dma.vmem_to_hbm [thread:$0]  %s38, 128, %s1, [#allocation3]
    $region9: #{post_processor_action_prob.1} parent=1 // pred_fallthru
      _
    // Predicated region
    $region10: #{post_processor_action_prob.1} parent=1 // pred_check
      _
    $region11: #{post_processor_action_prob.1} parent=1 // pred_check_branch
      %42 = sbr.rel (0) target = $region13
    $region12: #{post_processor_action_prob.1} parent=1 // pred_region
      %43 = dma.done [#allocation3], 128
    $region13: #{post_processor_action_prob.1} parent=1 // pred_fallthru
      _
    %44 = vsyncpa [#allocation3], 1

</llo_original>
